<compile_context>
chip_gen: v6e
topology: v6e:2x2x1
jax: 0.10.0
libtpu: 0.0.40
codegen_flags: <defaults>
</compile_context>

<pallas_src>
import functools

import jax
import jax.numpy as jnp
from jax.experimental import pallas as pl
from jax.experimental.pallas import tpu as pltpu


def _round_up(x: int, m: int) -> int:
    return ((x + m - 1) // m) * m


def _focal_loss_kernel(logits_ref, targets_ref, out_ref, acc_ref, *,
                       alpha, gamma, gamma_int, num_classes, batch,
                       chunk_len, block_b, mask_from):
    i = pl.program_id(0)
    nsteps = pl.num_programs(0)

    @pl.when(i == 0)
    def _():
        acc_ref[...] = jnp.zeros_like(acc_ref)

    x = logits_ref[...].astype(jnp.float32)      # (8*C, tb): class-major, chunk-minor
    t = targets_ref[...]                         # (8, tb) int32 class indices

    if num_classes == 2:
        # Margin / sigmoid-softplus specialization (binary classifier):
        #   margin = x_true - x_other
        #   ce     = softplus(-margin)
        #   1-p_t  = sigmoid(-margin)
        d = x[0:8, :] - x[8:16, :]                               # x(class0) - x(class1)
        sign = jnp.where(t == 0, jnp.float32(1.0), jnp.float32(-1.0))
        margin = d * sign                                        # (8, tb)
        e = jnp.exp(-jnp.abs(margin))                            # exp(-|margin|) in (0, 1]
        inv = pl.reciprocal(1.0 + e, approx=False)
        ce = jnp.maximum(-margin, 0.0) + jnp.log(1.0 + e)        # softplus(-margin)
        base = jnp.where(margin <= 0.0, 1.0, e) * inv            # sigmoid(-margin) = 1 - p_t
    else:
        # General small-C fallback: stable softmax unrolled over classes.
        xs = [x[c * 8:(c + 1) * 8, :] for c in range(num_classes)]
        m = xs[0]
        for c in range(1, num_classes):
            m = jnp.maximum(m, xs[c])
        sum_ex = jnp.zeros_like(m)
        shifted_t = jnp.zeros_like(m)
        ex_t = jnp.zeros_like(m)
        for c in range(num_classes):
            sh = xs[c] - m
            ex = jnp.exp(sh)
            sum_ex = sum_ex + ex
            sel = (t == c)
            shifted_t = jnp.where(sel, sh, shifted_t)
            ex_t = jnp.where(sel, ex, ex_t)
        ce = jnp.log(sum_ex) - shifted_t
        p_t = ex_t * pl.reciprocal(sum_ex, approx=False)
        base = jnp.maximum(1.0 - p_t, 0.0)

    if gamma_int is not None:
        # Integer gamma (default 2.0): cheap VPU multiplies, no transcendentals.
        if gamma_int == 0:
            mod = jnp.ones_like(base)
        else:
            mod = base
            for _ in range(gamma_int - 1):
                mod = mod * base
    else:
        # Non-integer gamma: clamped exp/log (EUP), NaN-safe at base == 0.
        mod = jnp.where(base > 0.0,
                        jnp.exp(gamma * jnp.log(jnp.maximum(base, 1e-30))),
                        0.0)

    focal = mod * ce                                             # (8, tb)

    # Interior steps: unmasked accumulate (no iota / compare / select).
    @pl.when(i < mask_from)
    def _():
        acc_ref[...] += focal

    # Trailing step(s) that may contain padded samples: mask with a select
    # (select, not multiply -> safe even against NaN/Inf in padding).
    @pl.when(i >= mask_from)
    def _():
        col = i * block_b + jax.lax.broadcasted_iota(jnp.int32, focal.shape, 1)
        row = jax.lax.broadcasted_iota(jnp.int32, focal.shape, 0)
        valid = (col < chunk_len) & (row * chunk_len + col < batch)
        acc_ref[...] += jnp.where(valid, focal, 0.0)

    # Finalize: one cross-lane reduction + alpha/B scale into the SMEM scalar.
    @pl.when(i == nsteps - 1)
    def _():
        out_ref[0, 0] = jnp.sum(acc_ref[...]) * jnp.float32(alpha / batch)


def focal_loss(logits, targets, alpha: float = 1.0, gamma: float = 2.0,
               block_b: int = 32768):
    """logits: [B, C] float (f32 or bf16), targets: [B] int. Returns scalar f32.

    Designed for small C (the gender classifier uses C=2); the packed layout
    keeps 8*C sublane rows per lane-tile, so very large C would blow up VMEM.
    """
    B, C = logits.shape
    NC = 8  # batch chunks packed along sublanes (dense for f32/bf16 logits & i32 targets)

    # Lane tile: multiple of 128, capped so (double-buffered inputs + accumulator)
    # stays ~<= 12 MiB -> fits default scoped VMEM on v5e (16 MiB) / v6e / v7x (32 MiB).
    itemsize = jnp.dtype(logits.dtype).itemsize
    bytes_per_col = 2 * (NC * C * itemsize + NC * 4) + NC * 4
    vmem_cap_cols = (12 * 1024 * 1024) // bytes_per_col
    tb_max = max(128, (min(int(block_b), int(vmem_cap_cols)) // 128) * 128)

    # Packed lane extent: exact multiple of the tile (padding folded into the
    # packing relayout below -- no separate pad pass, no ragged trailing block).
    L0 = _round_up(-(-B // NC), 128)
    nsteps = -(-L0 // tb_max)
    tb = _round_up(-(-L0 // nsteps), 128)
    L = nsteps * tb
    Bp = NC * L
    pad = Bp - B

    lg = logits
    tg = targets.astype(jnp.int32)
    if pad:
        lg = jnp.pad(lg, ((0, pad), (0, 0)))
        tg = jnp.pad(tg, ((0, pad),))
    # Class-major, chunk-minor packing: row c*8 + r holds class c of batch chunk r.
    lg = jnp.transpose(lg.reshape(NC, L, C), (2, 0, 1)).reshape(C * NC, L)
    tg = tg.reshape(NC, L)                                      # (8, L) dense int32

    # First grid step that can contain an invalid (padded) sample.
    mask_from = max(B - (NC - 1) * L, 0) // tb

    g = float(gamma)
    gamma_int = int(g) if (g.is_integer() and 0.0 <= g <= 8.0) else None

    kernel = functools.partial(
        _focal_loss_kernel,
        alpha=float(alpha), gamma=g, gamma_int=gamma_int,
        num_classes=C, batch=B, chunk_len=L, block_b=tb, mask_from=mask_from)

    out = pl.pallas_call(
        kernel,
        out_shape=jax.ShapeDtypeStruct((1, 1), jnp.float32),
        grid=(nsteps,),
        in_specs=[
            pl.BlockSpec((C * NC, tb), lambda i: (0, i)),   # packed logits tile
            pl.BlockSpec((NC, tb), lambda i: (0, i)),       # packed targets tile
        ],
        out_specs=pl.BlockSpec((1, 1), lambda i: (0, 0),
                               memory_space=pltpu.MemorySpace.SMEM),
        scratch_shapes=[pltpu.VMEM((NC, tb), jnp.float32)],  # per-lane accumulator
        compiler_params=pltpu.CompilerParams(
            dimension_semantics=("arbitrary",)),             # accumulation axis
    )(lg, tg)
    return out[0, 0]


def focal_loss_ref(logits, targets, alpha=1.0, gamma=2.0):
    """Pure-JAX reference mirroring the PyTorch forward."""
    logp = jax.nn.log_softmax(logits.astype(jnp.float32), axis=-1)
    ce = -jnp.take_along_axis(logp, targets[:, None].astype(jnp.int32), axis=-1)[:, 0]
    p_t = jnp.exp(-ce)
    return jnp.mean(alpha * (1.0 - p_t) ** gamma * ce)


if __name__ == "__main__":
    key = jax.random.PRNGKey(0)
    k1, k2, k3, k4 = jax.random.split(key, 4)

    # Small shapes consistent with the module: [batch, num_classes] logits,
    # [batch] integer labels (gender classifier -> 2 classes).
    B, C = 8, 2
    logits = jax.random.normal(k1, (B, C), dtype=jnp.float32) * 2.0
    targets = jax.random.randint(k2, (B,), 0, C, dtype=jnp.int32)

    out = jax.block_until_ready(focal_loss(logits, targets, alpha=1.0, gamma=2.0))
    ref = focal_loss_ref(logits, targets, alpha=1.0, gamma=2.0)
    assert jnp.allclose(out, ref, atol=1e-5, rtol=1e-5), (out, ref)

    # Non-default alpha and non-integer gamma (exercises the exp/log gamma path).
    out2 = jax.block_until_ready(focal_loss(logits, targets, alpha=0.25, gamma=1.5))
    ref2 = focal_loss_ref(logits, targets, alpha=0.25, gamma=1.5)
    assert jnp.allclose(out2, ref2, atol=1e-5, rtol=1e-5), (out2, ref2)

    # Batch that is not a multiple of the chunking and spans several grid steps
    # (forces multi-step accumulation + the trailing-step padding mask).
    B2 = 4000
    logits2 = jax.random.normal(k3, (B2, C), dtype=jnp.float32) * 3.0
    targets2 = jax.random.randint(k4, (B2,), 0, C, dtype=jnp.int32)
    out3 = jax.block_until_ready(
        focal_loss(logits2, targets2, alpha=1.0, gamma=2.0, block_b=128))
    ref3 = focal_loss_ref(logits2, targets2, alpha=1.0, gamma=2.0)
    assert jnp.allclose(out3, ref3, atol=1e-5, rtol=1e-4), (out3, ref3)

    print("KERNEL_OK")
</pallas_src>

<mosaic_0001>
module attributes {stable_mosaic.version = 11 : i64} {
  func.func @_focal_loss_kernel(%arg0: i32, %arg1: memref<16x128xf32, #tpu.memory_space<vmem>>, %arg2: memref<8x128xi32, #tpu.memory_space<vmem>>, %arg3: memref<1x1xf32, #tpu.memory_space<smem>>, %arg4: memref<8x128xf32, #tpu.memory_space<vmem>>) attributes {dimension_semantics = [#tpu.dimension_semantics<arbitrary>], iteration_bounds = array<i64: 1>, scalar_prefetch = 0 : i64, scratch_operands = 1 : i64, tpu.core_type = #tpu.core_type<tc>, window_params = [{transform_indices = @transform_0, window_bounds = array<i64: 16, 128>}, {transform_indices = @transform_1, window_bounds = array<i64: 8, 128>}, {transform_indices = @transform_2, window_bounds = array<i64: 1, 1>}]} {
    %c0_i32 = arith.constant 0 : i32
    %0 = arith.cmpi eq, %arg0, %c0_i32 : i32
    %1 = arith.extui %0 : i1 to i32
    %c0_i32_0 = arith.constant 0 : i32
    %2 = arith.cmpi ne, %1, %c0_i32_0 : i32
    scf.if %2 {
      %cst_19 = arith.constant 0.000000e+00 : f32
      %45 = vector.broadcast %cst_19 : f32 to vector<8x128xf32>
      %c0_20 = arith.constant 0 : index
      %c0_21 = arith.constant 0 : index
      %46 = vector.load %arg4[%c0_20, %c0_21] : memref<8x128xf32, #tpu.memory_space<vmem>>, vector<8x128xf32>
      tpu.vector_store %arg4[%c0_20, %c0_21], %45 {strides = array<i32>} : memref<8x128xf32, #tpu.memory_space<vmem>>, vector<8x128xf32>,
    } else {
    }
    %c0 = arith.constant 0 : index
    %c0_1 = arith.constant 0 : index
    %3 = vector.load %arg1[%c0, %c0_1] : memref<16x128xf32, #tpu.memory_space<vmem>>, vector<16x128xf32>
    %c0_2 = arith.constant 0 : index
    %c0_3 = arith.constant 0 : index
    %4 = vector.load %arg2[%c0_2, %c0_3] : memref<8x128xi32, #tpu.memory_space<vmem>>, vector<8x128xi32>
    %5 = vector.extract_strided_slice %3 {offsets = [0, 0], sizes = [8, 128], strides = [1, 1]} : vector<16x128xf32> to vector<8x128xf32>
    %6 = vector.extract_strided_slice %3 {offsets = [8, 0], sizes = [8, 128], strides = [1, 1]} : vector<16x128xf32> to vector<8x128xf32>
    %7 = arith.subf %5, %6 : vector<8x128xf32>
    %c0_i32_4 = arith.constant 0 : i32
    %8 = vector.broadcast %c0_i32_4 : i32 to vector<8x128xi32>
    %9 = arith.cmpi eq, %4, %8 : vector<8x128xi32>
    %cst = arith.constant 1.000000e+00 : f32
    %cst_5 = arith.constant -1.000000e+00 : f32
    %10 = vector.broadcast %cst : f32 to vector<8x128xf32>
    %11 = vector.broadcast %cst_5 : f32 to vector<8x128xf32>
    %12 = arith.select %9, %10, %11 : vector<8x128xi1>, vector<8x128xf32>
    %13 = arith.mulf %7, %12 : vector<8x128xf32>
    %14 = math.absf %13 : vector<8x128xf32>
    %cst_6 = arith.constant 0.000000e+00 : f32
    %15 = vector.broadcast %cst_6 : f32 to vector<8x128xf32>
    %16 = arith.subf %15, %14 : vector<8x128xf32>
    %17 = math.exp %16 : vector<8x128xf32>
    %cst_7 = arith.constant 1.000000e+00 : f32
    %18 = vector.broadcast %cst_7 : f32 to vector<8x128xf32>
    %19 = arith.addf %18, %17 : vector<8x128xf32>
    %20 = tpu.reciprocal %19 : vector<8x128xf32> -> vector<8x128xf32>
    %cst_8 = arith.constant 0.000000e+00 : f32
    %21 = vector.broadcast %cst_8 : f32 to vector<8x128xf32>
    %22 = arith.subf %21, %13 : vector<8x128xf32>
    %cst_9 = arith.constant 0.000000e+00 : f32
    %23 = vector.broadcast %cst_9 : f32 to vector<8x128xf32>
    %24 = arith.maximumf %22, %23 : vector<8x128xf32>
    %cst_10 = arith.constant 1.000000e+00 : f32
    %25 = vector.broadcast %cst_10 : f32 to vector<8x128xf32>
    %26 = arith.addf %25, %17 : vector<8x128xf32>
    %27 = math.log %26 : vector<8x128xf32>
    %28 = arith.addf %24, %27 : vector<8x128xf32>
    %cst_11 = arith.constant 0.000000e+00 : f32
    %29 = vector.broadcast %cst_11 : f32 to vector<8x128xf32>
    %30 = arith.cmpf ole, %13, %29 : vector<8x128xf32>
    %cst_12 = arith.constant 1.000000e+00 : f32
    %31 = vector.broadcast %cst_12 : f32 to vector<8x128xf32>
    %32 = arith.select %30, %31, %17 : vector<8x128xi1>, vector<8x128xf32>
    %33 = arith.mulf %32, %20 : vector<8x128xf32>
    %34 = arith.mulf %33, %33 : vector<8x128xf32>
    %35 = arith.mulf %34, %28 : vector<8x128xf32>
    %c0_i32_13 = arith.constant 0 : i32
    %36 = arith.cmpi slt, %arg0, %c0_i32_13 : i32
    %37 = arith.extui %36 : i1 to i32
    %c0_i32_14 = arith.constant 0 : i32
    %38 = arith.cmpi ne, %37, %c0_i32_14 : i32
    scf.if %38 {
      %c0_19 = arith.constant 0 : index
      %c0_20 = arith.constant 0 : index
      %45 = vector.load %arg4[%c0_19, %c0_20] : memref<8x128xf32, #tpu.memory_space<vmem>>, vector<8x128xf32>
      %46 = arith.addf %45, %35 : vector<8x128xf32>
      %c0_21 = arith.constant 0 : index
      %c0_22 = arith.constant 0 : index
      %47 = vector.load %arg4[%c0_21, %c0_22] : memref<8x128xf32, #tpu.memory_space<vmem>>, vector<8x128xf32>
      tpu.vector_store %arg4[%c0_21, %c0_22], %46 {strides = array<i32>} : memref<8x128xf32, #tpu.memory_space<vmem>>, vector<8x128xf32>,
    } else {
    }
    %c0_i32_15 = arith.constant 0 : i32
    %39 = arith.cmpi sge, %arg0, %c0_i32_15 : i32
    %40 = arith.extui %39 : i1 to i32
    %c0_i32_16 = arith.constant 0 : i32
    %41 = arith.cmpi ne, %40, %c0_i32_16 : i32
    scf.if %41 {
      %c128_i32 = arith.constant 128 : i32
      %45 = arith.muli %arg0, %c128_i32 : i32
      %46 = tpu.iota {dimensions = array<i32: 1>} : vector<8x128xi32>
      %47 = vector.broadcast %45 : i32 to vector<8x128xi32>
      %48 = arith.addi %47, %46 : vector<8x128xi32>
      %49 = tpu.iota {dimensions = array<i32: 0>} : vector<8x128xi32>
      %c128_i32_19 = arith.constant 128 : i32
      %50 = vector.broadcast %c128_i32_19 : i32 to vector<8x128xi32>
      %51 = arith.cmpi slt, %48, %50 : vector<8x128xi32>
      %c128_i32_20 = arith.constant 128 : i32
      %52 = vector.broadcast %c128_i32_20 : i32 to vector<8x128xi32>
      %53 = arith.muli %49, %52 : vector<8x128xi32>
      %54 = arith.addi %53, %48 : vector<8x128xi32>
      %c8_i32 = arith.constant 8 : i32
      %55 = vector.broadcast %c8_i32 : i32 to vector<8x128xi32>
      %56 = arith.cmpi slt, %54, %55 : vector<8x128xi32>
      %57 = arith.andi %51, %56 : vector<8x128xi1>
      %c0_21 = arith.constant 0 : index
      %c0_22 = arith.constant 0 : index
      %58 = vector.load %arg4[%c0_21, %c0_22] : memref<8x128xf32, #tpu.memory_space<vmem>>, vector<8x128xf32>
      %cst_23 = arith.constant 0.000000e+00 : f32
      %59 = vector.broadcast %cst_23 : f32 to vector<8x128xf32>
      %60 = arith.select %57, %35, %59 : vector<8x128xi1>, vector<8x128xf32>
      %61 = arith.addf %58, %60 : vector<8x128xf32>
      %c0_24 = arith.constant 0 : index
      %c0_25 = arith.constant 0 : index
      %62 = vector.load %arg4[%c0_24, %c0_25] : memref<8x128xf32, #tpu.memory_space<vmem>>, vector<8x128xf32>
      tpu.vector_store %arg4[%c0_24, %c0_25], %61 {strides = array<i32>} : memref<8x128xf32, #tpu.memory_space<vmem>>, vector<8x128xf32>,
    } else {
    }
    %c0_i32_17 = arith.constant 0 : i32
    %42 = arith.cmpi eq, %arg0, %c0_i32_17 : i32
    %43 = arith.extui %42 : i1 to i32
    %c0_i32_18 = arith.constant 0 : i32
    %44 = arith.cmpi ne, %43, %c0_i32_18 : i32
    scf.if %44 {
      %c0_19 = arith.constant 0 : index
      %c0_20 = arith.constant 0 : index
      %45 = vector.load %arg4[%c0_19, %c0_20] : memref<8x128xf32, #tpu.memory_space<vmem>>, vector<8x128xf32>
      %46 = vector.shape_cast %45 : vector<8x128xf32> to vector<1x8x128xf32>
      %cst_21 = arith.constant dense<0.000000e+00> : vector<1xf32>
      %47 = vector.multi_reduction <add>, %46, %cst_21 [1, 2] : vector<1x8x128xf32> to vector<1xf32>
      %48 = vector.shape_cast %47 : vector<1xf32> to vector<1x1x1xf32>
      %49 = vector.extract %48[0, 0, 0] : f32 from vector<1x1x1xf32>
      %cst_22 = arith.constant 1.250000e-01 : f32
      %50 = arith.mulf %49, %cst_22 : f32
      %c0_23 = arith.constant 0 : index
      %c0_24 = arith.constant 0 : index
      %51 = memref.load %arg3[%c0_23, %c0_24] : memref<1x1xf32, #tpu.memory_space<smem>>
      memref.store %50, %arg3[%c0_23, %c0_24] : memref<1x1xf32, #tpu.memory_space<smem>>
    } else {
    }
    return
  }
  func.func @transform_0(%arg0: i32) -> (i32, i32) {
    %c0_i32 = arith.constant 0 : i32
    %c0_i32_0 = arith.constant 0 : i32
    return %c0_i32, %arg0 : i32, i32
  }
  func.func @transform_1(%arg0: i32) -> (i32, i32) {
    %c0_i32 = arith.constant 0 : i32
    %c0_i32_0 = arith.constant 0 : i32
    return %c0_i32, %arg0 : i32, i32
  }
  func.func @transform_2(%arg0: i32) -> (i32, i32) {
    %c0_i32 = arith.constant 0 : i32
    %c0_i32_0 = arith.constant 0 : i32
    %c0_i32_1 = arith.constant 0 : i32
    return %c0_i32, %c0_i32_0 : i32, i32
  }
}

</mosaic_0001>

<llo_original>
// kernel: tpu_custom_call.1
$region0: #{tpu_custom_call.1}
  #allocation0 [shape = 'u32[]', space=smem, size = 0x4, offset = 0x4, fixed_abs, tag = 'smem constant byte address 0x4 - core index']
  #allocation1 [shape = 'u32[144,128]{1,0:T(1,128)}', space=vmem, size = 0x12000, scoped, tag = 'internal scratch']
  #allocation2 [shape = 'f32[8,128]{1,0:T(8,128)}', space=vmem, size = 0x1000, scoped, tag = 'scratch operand']
  %s0 = inlined_call_operand.hbm [shape: f32[16,128], index: 0, kind: input, shape index: {}]
  %s1 = inlined_call_operand.hbm [shape: s32[8,128], index: 1, kind: input, shape index: {}]
  %s2 = inlined_call_operand.hbm [shape: f32[1,1], index: 2, kind: output, shape index: {}]
  %s3 = sld [smem:[#allocation0]]
  $region42: #{tpu_custom_call.1} parent=0
    _
  %s5 = ssub.s32 1, %s3
  %s6 = scalar_select 0, %s5, %s3
  $region1: #{tpu_custom_call.1} parent=0
    #allocation3 [shape = 'u8[8192]{0}', space=vmem, size = 0x2000, scoped, tag = 'input window, operand 0, single buffered']
    #allocation4 [shape = 's32[1]{0}', space=sflag, size = 0x4, scoped, tag = 'scoped memory for tpu_custom_call.1']
    #allocation5 [shape = 's32[1]{0}', space=sflag, size = 0x4, scoped, tag = 'scoped memory for tpu_custom_call.1']
    #allocation6 [shape = 'u8[4096]{0}', space=vmem, size = 0x1000, scoped, tag = 'input window, operand 1, single buffered']
    #allocation7 [shape = 's32[1]{0}', space=sflag, size = 0x4, scoped, tag = 'scoped memory for tpu_custom_call.1']
    #allocation8 [shape = 'u8[512]{0}', space=smem, size = 0x200, scoped, tag = 'output window, operand 0, single buffered']
    %7 = vsyncpa [#allocation4], 0
    %8 = vsyncpa [#allocation7], 0
    %9 = vsyncpa [#allocation5], 0
    // Predicated region
    $region2: #{tpu_custom_call.1} parent=1 // pred_check
      _
    $region3: #{tpu_custom_call.1} parent=1 // pred_check_branch
      %11 = sbr.rel (0) target = $region5
    $region4: #{tpu_custom_call.1} parent=1 // pred_region
      %s13 = ssub.s32 256, 256
      %14 = vsyncadd [#allocation4], %s13
      %s15 = sshll.u32 [#allocation3], 4
      %s16 = int_to_ptr.vmem [resolvable:$true] %s15
      %21 = dma.hbm_to_vmem [thread:$0]  %s0, 256, %s16, [#allocation4], 128, 128, 8
    $region5: #{tpu_custom_call.1} parent=1 // pred_fallthru
      _
    // Predicated region
    $region6: #{tpu_custom_call.1} parent=1 // pred_check
      _
    $region7: #{tpu_custom_call.1} parent=1 // pred_check_branch
      %23 = sbr.rel (0) target = $region9
    $region8: #{tpu_custom_call.1} parent=1 // pred_region
      %s25 = ssub.s32 128, 128
      %26 = vsyncadd [#allocation7], %s25
      %s28 = sshll.u32 [#allocation6], 4
      %s29 = int_to_ptr.vmem [resolvable:$true] %s28
      %31 = dma.hbm_to_vmem [thread:$0]  %s1, 128, %s29, [#allocation7]
    $region9: #{tpu_custom_call.1} parent=1 // pred_fallthru
      _
    // Predicated region
    $region10: #{tpu_custom_call.1} parent=1 // pred_check
      _
    $region11: #{tpu_custom_call.1} parent=1 // pred_check_branch
      %33 = sbr.rel (0) target = $region13
    $region12: #{tpu_custom_call.1} parent=1 // pred_region
      %34 = dma.done [#allocation4], 256
    $region13: #{tpu_custom_call.1} parent=1 // pred_fallthru
      _
    // Predicated region
    $region14: #{tpu_custom_call.1} parent=1 // pred_check
      _
    $region15: #{tpu_custom_call.1} parent=1 // pred_check_branch
      %36 = sbr.rel (0) target = $region17
    $region16: #{tpu_custom_call.1} parent=1 // pred_region
      %37 = dma.done [#allocation7], 128
    $region17: #{tpu_custom_call.1} parent=1 // pred_fallthru
      _
    %p38 = scmp.eq.s32.totalorder 0, 0
    // Predicated region
    $region18: #{tpu_custom_call.1} parent=1 // pred_check
      %p39 = pneg %p38
    $region19: #{tpu_custom_call.1} parent=1 // pred_check_branch
      %41 = sbr.rel (%p39) target = $region21
    $region20: #{tpu_custom_call.1} parent=1 // pred_region
      %42 = vst [vmem:[#allocation2] sm:$0xff] 0.0
    $region21: #{tpu_custom_call.1} parent=1 // pred_fallthru
      _
    %v43 = vld [vmem:[#allocation3] sm:$0xff]
    %v44 = vld [vmem:[#allocation3 + $0x8] sm:$0xff]
    %v45 = vld [vmem:[#allocation6] sm:$0xff]
    %v46 = vsub.f32 %v43, %v44
    %vm47 = vcmp.eq.s32.totalorder %v45, 0
    %v48 = vsel %vm47, 1.0, -1.0
    %v49 = vmul.f32 %v46, %v48
    %v50 = vand.u32 2147483647, %v49
    %v51 = vsub.f32 0.0, %v50
    %v52 = vmul.f32 %v51, 1.442695
    %v53 = vpow.pop %v52
    %v54 = vadd.f32 %v53, 1.0
    %v55 = vrcp.pop %v54
    %v56 = vsub.f32 0.0, %v49
    %v57 = vmax.f32 %v56, 0.0
    %v58 = vlog2.pop %v54
    %v59 = vmul.f32 %v58, 0.6931472
    %v60 = vadd.f32 %v57, %v59
    %vm61 = vcmp.le.f32.partialorder %v49, 0.0
    %v62 = vsel %vm61, 1.0, %v53
    %v63 = vmul.f32 %v62, %v55
    %v64 = vmul.f32 %v63, %v63
    %v65 = vmul.f32 %v64, %v60
    %p66 = scmp.lt.s32.totalorder 0, 0
    // Predicated region
    $region22: #{tpu_custom_call.1} parent=1 // pred_check
      %p67 = pneg %p66
    $region23: #{tpu_custom_call.1} parent=1 // pred_check_branch
      %69 = sbr.rel (%p67) target = $region25
    $region24: #{tpu_custom_call.1} parent=1 // pred_region
      %v70 = vld [vmem:[#allocation2] sm:$0xff]
      %v71 = vadd.f32 %v70, %v65
      %72 = vst [vmem:[#allocation2] sm:$0xff] %v71
    $region25: #{tpu_custom_call.1} parent=1 // pred_fallthru
      _
    %p73 = scmp.ge.s32.totalorder 0, 0
    // Predicated region
    $region26: #{tpu_custom_call.1} parent=1 // pred_check
      %p74 = pneg %p73
    $region27: #{tpu_custom_call.1} parent=1 // pred_check_branch
      %76 = sbr.rel (%p74) target = $region29
    $region28: #{tpu_custom_call.1} parent=1 // pred_region
      %s77 = smul.u32 0, 128
      %v78 = vlaneseq
      %v79 = vand.u32 %v78, 127
      %v80 = vstv %s77
      %v81 = vadd.s32 %v80, %v79
      %v82 = vlaneseq
      %v83 = vshrl.u32 %v82, 7
      %vm84 = vcmp.lt.s32.totalorder %v81, 128
      %v85 = vmul.u32 %v83, 128
      %v86 = vadd.s32 %v85, %v81
      %vm87 = vcmp.lt.s32.totalorder %v86, 8
      %vm88 = vmand %vm84, %vm87
      %v89 = vld [vmem:[#allocation2] sm:$0xff]
      %v90 = vsel %vm88, %v65, 0.0
      %v91 = vadd.f32 %v89, %v90
      %92 = vst [vmem:[#allocation2] sm:$0xff] %v91
    $region29: #{tpu_custom_call.1} parent=1 // pred_fallthru
      _
    // Predicated region
    $region30: #{tpu_custom_call.1} parent=1 // pred_check
      %p93 = pneg %p38
    $region31: #{tpu_custom_call.1} parent=1 // pred_check_branch
      %95 = sbr.rel (%p93) target = $region33
    $region32: #{tpu_custom_call.1} parent=1 // pred_region
      %v96 = vld [vmem:[#allocation2] sm:$0xff]
      %97 = vadd.xlane.f32.xlu0 %v96
      %v98 = vpop.xlane.xlu0 %97
      %v99 = vrot.slane %v98, 4
      %v100 = vadd.f32 %v98, %v99
      %v101 = vrot.slane %v100, 2
      %v102 = vadd.f32 %v100, %v101
      %v103 = vrot.slane %v102, 1
      %v104 = vadd.f32 %v102, %v103
      %s105 = vtos %v104
      %s106 = smul.f32 %s105, 0.125
      %s107 = scalar_lea.smem [#allocation8], 0
      %108 = sst [smem:[%s107]] %s106
    $region33: #{tpu_custom_call.1} parent=1 // pred_fallthru
      _
    // Predicated region
    $region34: #{tpu_custom_call.1} parent=1 // pred_check
      _
    $region35: #{tpu_custom_call.1} parent=1 // pred_check_branch
      %110 = sbr.rel (0) target = $region37
    $region36: #{tpu_custom_call.1} parent=1 // pred_region
      %s112 = ssub.s32 16, 16
      %113 = vsyncadd [#allocation5], %s112
      %116 = dma.smem_to_hbm [#allocation8], 16, %s2, [#allocation5]
    $region37: #{tpu_custom_call.1} parent=1 // pred_fallthru
      _
    // Predicated region
    $region38: #{tpu_custom_call.1} parent=1 // pred_check
      _
    $region39: #{tpu_custom_call.1} parent=1 // pred_check_branch
      %118 = sbr.rel (0) target = $region41
    $region40: #{tpu_custom_call.1} parent=1 // pred_region
      %119 = dma.done [#allocation5], 16
    $region41: #{tpu_custom_call.1} parent=1 // pred_fallthru
      _
    %120 = sfence
    %121 = vsyncpa [#allocation4], 1
    %122 = vsyncpa [#allocation7], 1
    %123 = vsyncpa [#allocation5], 1

</llo_original>
